<compile_context>
chip_gen: v7x
topology: tpu7x:2x2x1
jax: 0.10.0
libtpu: 0.0.40
codegen_flags: <defaults>
</compile_context>

<pallas_src>
import jax
import jax.numpy as jnp
from jax.experimental import pallas as pl
from jax.experimental.pallas import tpu as pltpu

LANE = 128  # TPU lane width; weight/bias slab is padded to this many columns.


# ----------------------------- kernel factory --------------------------------
def _make_gcn_kernel(layer_dims):
    """Build a fused GCN kernel with static slab offsets baked in.

    layer_dims: tuple of (fan_in, fan_out) per layer, e.g. ((32,128),(128,64),(64,16),(16,8)).
    Slab layout (f32, 128 lanes):
      rows [w_off[i] : w_off[i]+fi)  -> W_i padded to 128 columns
      rows [bias_row0 + i]           -> b_i padded to 128 columns
    """
    w_offsets = []
    row = 0
    for fi, _ in layer_dims:
        w_offsets.append(row)
        row += fi
    bias_row0 = row
    n_layers = len(layer_dims)

    def kernel(a_ref, x_ref, p_ref, o_ref):
        a = a_ref[...]          # (N, N)   f32, normalized adjacency (one DMA)
        h = x_ref[...]          # (N, Fin) f32, node features
        for li, (fi, fo) in enumerate(layer_dims):
            last = li == n_layers - 1
            # Last layer stays 128-lane padded -> lane-dense output store.
            cols = LANE if last else fo
            r0 = w_offsets[li]
            w = p_ref[r0:r0 + fi, 0:cols]                       # static slice
            b = p_ref[bias_row0 + li:bias_row0 + li + 1, 0:cols]
            # Uniform order A @ (H @ W): every GEMM is one padded MXU pass here.
            hw = jnp.dot(h, w, preferred_element_type=jnp.float32)
            h = jnp.dot(a, hw, preferred_element_type=jnp.float32) + b
            if not last:
                h = jnp.maximum(h, 0.0)                         # ReLU (f32 epilogue)
        o_ref[...] = h                                          # (N, 128) unmasked store

    return kernel


# ----------------------------- operand packing --------------------------------
def pack_gcn_params(params, lane=LANE):
    """Pack all weights + biases into one lane-padded f32 slab (done once, not per call)."""
    blocks = []
    for w, _ in params:
        fi, fo = w.shape
        assert fo <= lane, "fan_out must fit in one lane group"
        wp = jnp.zeros((fi, lane), jnp.float32).at[:, :fo].set(w.astype(jnp.float32))
        blocks.append(wp)
    for _, b in params:
        fo = b.shape[0]
        bp = jnp.zeros((1, lane), jnp.float32).at[0, :fo].set(b.astype(jnp.float32))
        blocks.append(bp)
    slab = jnp.concatenate(blocks, axis=0)
    pad = (-slab.shape[0]) % 8          # sublane-friendly row count
    if pad:
        slab = jnp.concatenate([slab, jnp.zeros((pad, lane), jnp.float32)], axis=0)
    return slab


# ------------------------------ wrapper ---------------------------------------
def gcn_forward(a_hat, x, param_slab, layer_dims):
    """Single fused pallas_call for the whole GCN stack (eval mode).

    a_hat:      (N, N)       f32 normalized adjacency
    x:          (N, Fin)     f32 node features
    param_slab: (rows, 128)  f32 packed weights+biases (from pack_gcn_params)
    """
    n = x.shape[0]
    n_classes = layer_dims[-1][1]

    flops = 0
    for fi, fo in layer_dims:
        flops += 2 * n * fi * fo      # H @ W
        flops += 2 * n * n * fo       # A @ (H W)
    bytes_accessed = 4 * (a_hat.size + x.size + param_slab.size + n * LANE)

    out_padded = pl.pallas_call(
        _make_gcn_kernel(layer_dims),
        out_shape=jax.ShapeDtypeStruct((n, LANE), jnp.float32),   # lane-dense output
        cost_estimate=pl.CostEstimate(
            flops=flops, transcendentals=0, bytes_accessed=bytes_accessed),
        compiler_params=pltpu.CompilerParams(
            vmem_limit_bytes=32 * 1024 * 1024),
    )(a_hat.astype(jnp.float32), x.astype(jnp.float32), param_slab)

    return out_padded[:, :n_classes]


# --------------------------- pure-JAX reference -------------------------------
def gcn_reference(a_hat, x, params):
    h = x
    for i, (w, b) in enumerate(params):
        h = a_hat @ h @ w + b
        if i < len(params) - 1:
            h = jnp.maximum(h, 0.0)
    return h


# ------------------------------ param init -----------------------------------
def init_gcn_params(key, in_feats, n_classes, l1=128, l2=64, l3=16):
    """Deterministic Glorot-uniform weights + zero biases (matches DGL GraphConv init)."""
    dims = [(in_feats, l1), (l1, l2), (l2, l3), (l3, n_classes)]
    params = []
    for fi, fo in dims:
        key, sub = jax.random.split(key)
        limit = jnp.sqrt(6.0 / (fi + fo))
        w = jax.random.uniform(sub, (fi, fo), jnp.float32, -limit, limit)
        b = jnp.zeros((fo,), jnp.float32)
        params.append((w, b))
    return params


def build_normalized_adjacency(key, n_nodes):
    """Random symmetric graph -> D^{-1/2} A D^{-1/2} (dense f32) glue in plain JAX."""
    raw = jax.random.bernoulli(key, 0.3, (n_nodes, n_nodes)).astype(jnp.float32)
    adj = jnp.clip(raw + raw.T + jnp.eye(n_nodes, dtype=jnp.float32), 0.0, 1.0)
    deg = jnp.sum(adj, axis=1)
    d_inv_sqrt = 1.0 / jnp.sqrt(jnp.maximum(deg, 1.0))
    return adj * d_inv_sqrt[:, None] * d_inv_sqrt[None, :]


# --------------------------------- main ---------------------------------------
if __name__ == "__main__":
    key = jax.random.PRNGKey(0)
    k_graph, k_feat, k_param = jax.random.split(key, 3)

    n_nodes = 16
    in_feats = 32
    n_classes = 8

    a_hat = build_normalized_adjacency(k_graph, n_nodes)              # (16, 16) f32
    x = jax.random.normal(k_feat, (n_nodes, in_feats), jnp.float32)   # (16, 32) f32
    params = init_gcn_params(k_param, in_feats, n_classes)
    layer_dims = tuple((w.shape[0], w.shape[1]) for w, _ in params)

    # One-time prep (outside the per-call path): pack weights+biases into one slab.
    param_slab = jax.block_until_ready(pack_gcn_params(params))       # (248, 128) f32

    out = gcn_forward(a_hat, x, param_slab, layer_dims)               # (16, 8) logits
    out = jax.block_until_ready(out)

    assert out.shape == (n_nodes, n_classes), out.shape
    assert jnp.all(jnp.isfinite(out))

    # Correctness vs f32 reference; tolerance tightened vs previous bf16 pipeline.
    ref = gcn_reference(a_hat, x, params)
    assert jnp.allclose(out, ref, rtol=3e-2, atol=3e-2), (
        float(jnp.max(jnp.abs(out - ref))))

    print("KERNEL_OK")
</pallas_src>

<mosaic_0001>
module attributes {stable_mosaic.version = 11 : i64} {
  func.func @kernel(%arg0: memref<16x16xf32, #tpu.memory_space<vmem>>, %arg1: memref<16x32xf32, #tpu.memory_space<vmem>>, %arg2: memref<248x128xf32, #tpu.memory_space<vmem>>, %arg3: memref<16x128xf32, #tpu.memory_space<vmem>>) attributes {dimension_semantics = [], scalar_prefetch = 0 : i64, scratch_operands = 0 : i64, tpu.core_type = #tpu.core_type<tc>} {
    %c0 = arith.constant 0 : index
    %c0_0 = arith.constant 0 : index
    %0 = vector.load %arg0[%c0, %c0_0] : memref<16x16xf32, #tpu.memory_space<vmem>>, vector<16x16xf32>
    %c0_1 = arith.constant 0 : index
    %c0_2 = arith.constant 0 : index
    %1 = vector.load %arg1[%c0_1, %c0_2] : memref<16x32xf32, #tpu.memory_space<vmem>>, vector<16x32xf32>
    %c0_3 = arith.constant 0 : index
    %c0_4 = arith.constant 0 : index
    %2 = vector.load %arg2[%c0_3, %c0_4] : memref<248x128xf32, #tpu.memory_space<vmem>>, vector<32x128xf32>
    %c240 = arith.constant 240 : index
    %c0_5 = arith.constant 0 : index
    %3 = vector.load %arg2[%c240, %c0_5] : memref<248x128xf32, #tpu.memory_space<vmem>>, vector<1x128xf32>
    %cst = arith.constant dense<0.000000e+00> : vector<16x128xf32>
    %4 = tpu.matmul %1, %2, %cst {dimension_numbers = #tpu.dot_dimension_numbers<[1], [0], [0], [1], [0, 0, 1, 1], [], []>} : vector<16x32xf32>, vector<32x128xf32>, vector<16x128xf32> -> vector<16x128xf32>
    %cst_6 = arith.constant dense<0.000000e+00> : vector<16x128xf32>
    %5 = tpu.matmul %0, %4, %cst_6 {dimension_numbers = #tpu.dot_dimension_numbers<[1], [0], [0], [1], [0, 0, 1, 1], [], []>} : vector<16x16xf32>, vector<16x128xf32>, vector<16x128xf32> -> vector<16x128xf32>
    %6 = vector.broadcast %3 : vector<1x128xf32> to vector<16x128xf32>
    %7 = arith.addf %5, %6 : vector<16x128xf32>
    %cst_7 = arith.constant 0.000000e+00 : f32
    %8 = vector.broadcast %cst_7 : f32 to vector<16x128xf32>
    %9 = arith.maximumf %7, %8 : vector<16x128xf32>
    %c32 = arith.constant 32 : index
    %c0_8 = arith.constant 0 : index
    %10 = vector.load %arg2[%c32, %c0_8] : memref<248x128xf32, #tpu.memory_space<vmem>>, vector<128x64xf32>
    %c241 = arith.constant 241 : index
    %c0_9 = arith.constant 0 : index
    %11 = vector.load %arg2[%c241, %c0_9] : memref<248x128xf32, #tpu.memory_space<vmem>>, vector<1x64xf32>
    %cst_10 = arith.constant dense<0.000000e+00> : vector<16x64xf32>
    %12 = tpu.matmul %9, %10, %cst_10 {dimension_numbers = #tpu.dot_dimension_numbers<[1], [0], [0], [1], [0, 0, 1, 1], [], []>} : vector<16x128xf32>, vector<128x64xf32>, vector<16x64xf32> -> vector<16x64xf32>
    %cst_11 = arith.constant dense<0.000000e+00> : vector<16x64xf32>
    %13 = tpu.matmul %0, %12, %cst_11 {dimension_numbers = #tpu.dot_dimension_numbers<[1], [0], [0], [1], [0, 0, 1, 1], [], []>} : vector<16x16xf32>, vector<16x64xf32>, vector<16x64xf32> -> vector<16x64xf32>
    %14 = vector.broadcast %11 : vector<1x64xf32> to vector<16x64xf32>
    %15 = arith.addf %13, %14 : vector<16x64xf32>
    %cst_12 = arith.constant 0.000000e+00 : f32
    %16 = vector.broadcast %cst_12 : f32 to vector<16x64xf32>
    %17 = arith.maximumf %15, %16 : vector<16x64xf32>
    %c160 = arith.constant 160 : index
    %c0_13 = arith.constant 0 : index
    %18 = vector.load %arg2[%c160, %c0_13] : memref<248x128xf32, #tpu.memory_space<vmem>>, vector<64x16xf32>
    %c242 = arith.constant 242 : index
    %c0_14 = arith.constant 0 : index
    %19 = vector.load %arg2[%c242, %c0_14] : memref<248x128xf32, #tpu.memory_space<vmem>>, vector<1x16xf32>
    %cst_15 = arith.constant dense<0.000000e+00> : vector<16x16xf32>
    %20 = tpu.matmul %17, %18, %cst_15 {dimension_numbers = #tpu.dot_dimension_numbers<[1], [0], [0], [1], [0, 0, 1, 1], [], []>} : vector<16x64xf32>, vector<64x16xf32>, vector<16x16xf32> -> vector<16x16xf32>
    %cst_16 = arith.constant dense<0.000000e+00> : vector<16x16xf32>
    %21 = tpu.matmul %0, %20, %cst_16 {dimension_numbers = #tpu.dot_dimension_numbers<[1], [0], [0], [1], [0, 0, 1, 1], [], []>} : vector<16x16xf32>, vector<16x16xf32>, vector<16x16xf32> -> vector<16x16xf32>
    %22 = vector.broadcast %19 : vector<1x16xf32> to vector<16x16xf32>
    %23 = arith.addf %21, %22 : vector<16x16xf32>
    %cst_17 = arith.constant 0.000000e+00 : f32
    %24 = vector.broadcast %cst_17 : f32 to vector<16x16xf32>
    %25 = arith.maximumf %23, %24 : vector<16x16xf32>
    %c224 = arith.constant 224 : index
    %c0_18 = arith.constant 0 : index
    %26 = vector.load %arg2[%c224, %c0_18] : memref<248x128xf32, #tpu.memory_space<vmem>>, vector<16x128xf32>
    %c243 = arith.constant 243 : index
    %c0_19 = arith.constant 0 : index
    %27 = vector.load %arg2[%c243, %c0_19] : memref<248x128xf32, #tpu.memory_space<vmem>>, vector<1x128xf32>
    %cst_20 = arith.constant dense<0.000000e+00> : vector<16x128xf32>
    %28 = tpu.matmul %25, %26, %cst_20 {dimension_numbers = #tpu.dot_dimension_numbers<[1], [0], [0], [1], [0, 0, 1, 1], [], []>} : vector<16x16xf32>, vector<16x128xf32>, vector<16x128xf32> -> vector<16x128xf32>
    %cst_21 = arith.constant dense<0.000000e+00> : vector<16x128xf32>
    %29 = tpu.matmul %0, %28, %cst_21 {dimension_numbers = #tpu.dot_dimension_numbers<[1], [0], [0], [1], [0, 0, 1, 1], [], []>} : vector<16x16xf32>, vector<16x128xf32>, vector<16x128xf32> -> vector<16x128xf32>
    %30 = vector.broadcast %27 : vector<1x128xf32> to vector<16x128xf32>
    %31 = arith.addf %29, %30 : vector<16x128xf32>
    %c0_22 = arith.constant 0 : index
    %c0_23 = arith.constant 0 : index
    %32 = vector.load %arg3[%c0_22, %c0_23] : memref<16x128xf32, #tpu.memory_space<vmem>>, vector<16x128xf32>
    tpu.vector_store %arg3[%c0_22, %c0_23], %31 {strides = array<i32>} : memref<16x128xf32, #tpu.memory_space<vmem>>, vector<16x128xf32>,
    return
  }
}

</mosaic_0001>

<llo_original>
// kernel: tpu_custom_call.1
$region0: #{tpu_custom_call.1}
  #allocation0 [shape = 'u32[]', space=smem, size = 0x4, offset = 0x4, fixed_abs, tag = 'smem constant byte address 0x4 - core index']
  #allocation1 [shape = 'u32[144,128]{1,0:T(1,128)}', space=vmem, size = 0x12000, scoped, tag = 'internal scratch']
  %s0 = inlined_call_operand.hbm [shape: f32[16,16], index: 0, kind: input, shape index: {}]
  %s1 = inlined_call_operand.hbm [shape: f32[16,32], index: 1, kind: input, shape index: {}]
  %s2 = inlined_call_operand.hbm [shape: f32[248,128], index: 2, kind: input, shape index: {}]
  %s3 = inlined_call_operand.hbm [shape: f32[16,128], index: 3, kind: output, shape index: {}]
  %s4 = sld [smem:[#allocation0]]
  $region34: #{tpu_custom_call.1} parent=0
    _
  %s6 = ssub.s32 1, %s4
  %s7 = scalar_select 0, %s6, %s4
  $region1: #{tpu_custom_call.1} parent=0
    #allocation2 [shape = 'u8[8192]{0}', space=vmem, size = 0x2000, scoped, tag = 'input window, operand 0, single buffered']
    #allocation3 [shape = 's32[1]{0}', space=sflag, size = 0x4, scoped, tag = 'scoped memory for tpu_custom_call.1']
    #allocation4 [shape = 's32[1]{0}', space=sflag, size = 0x4, scoped, tag = 'scoped memory for tpu_custom_call.1']
    #allocation5 [shape = 'u8[8192]{0}', space=vmem, size = 0x2000, scoped, tag = 'input window, operand 1, single buffered']
    #allocation6 [shape = 's32[1]{0}', space=sflag, size = 0x4, scoped, tag = 'scoped memory for tpu_custom_call.1']
    #allocation7 [shape = 'u8[126976]{0}', space=vmem, size = 0x1f000, scoped, tag = 'input window, operand 2, single buffered']
    #allocation8 [shape = 'u8[8192]{0}', space=vmem, size = 0x2000, scoped, tag = 'output window, operand 0, single buffered']
    %8 = vsyncpa [#allocation3], 0
    %9 = vsyncpa [#allocation6], 0
    %10 = vsyncpa [#allocation4], 0
    // Predicated region
    $region2: #{tpu_custom_call.1} parent=1 // pred_check
      _
    $region3: #{tpu_custom_call.1} parent=1 // pred_check_branch
      %12 = sbr.rel (0) target = $region5
    $region4: #{tpu_custom_call.1} parent=1 // pred_region
      %s14 = ssub.s32 256, 256
      %15 = vsyncadd [#allocation3], %s14
      %s16 = sshll.u32 [#allocation2], 4
      %s17 = int_to_ptr.vmem [resolvable:$true] %s16
      %22 = dma.hbm_to_vmem [thread:$0]  %s0, 256, %s17, [#allocation3], 128, 128, 8
    $region5: #{tpu_custom_call.1} parent=1 // pred_fallthru
      _
    // Predicated region
    $region6: #{tpu_custom_call.1} parent=1 // pred_check
      _
    $region7: #{tpu_custom_call.1} parent=1 // pred_check_branch
      %24 = sbr.rel (0) target = $region9
    $region8: #{tpu_custom_call.1} parent=1 // pred_region
      %s26 = ssub.s32 256, 256
      %27 = vsyncadd [#allocation6], %s26
      %s28 = sshll.u32 [#allocation5], 4
      %s29 = int_to_ptr.vmem [resolvable:$true] %s28
      %34 = dma.hbm_to_vmem [thread:$0]  %s1, 256, %s29, [#allocation6], 128, 128, 8
    $region9: #{tpu_custom_call.1} parent=1 // pred_fallthru
      _
    // Predicated region
    $region10: #{tpu_custom_call.1} parent=1 // pred_check
      _
    $region11: #{tpu_custom_call.1} parent=1 // pred_check_branch
      %36 = sbr.rel (0) target = $region13
    $region12: #{tpu_custom_call.1} parent=1 // pred_region
      %s38 = ssub.s32 3968, 3968
      %39 = vsyncadd [#allocation6], %s38
      %s40 = sshll.u32 [#allocation7], 4
      %s41 = int_to_ptr.vmem [resolvable:$true] %s40
      %46 = dma.hbm_to_vmem [thread:$0]  %s2, 3968, %s41, [#allocation6], 128, 128, 8
    $region13: #{tpu_custom_call.1} parent=1 // pred_fallthru
      _
    // Predicated region
    $region14: #{tpu_custom_call.1} parent=1 // pred_check
      _
    $region15: #{tpu_custom_call.1} parent=1 // pred_check_branch
      %48 = sbr.rel (0) target = $region17
    $region16: #{tpu_custom_call.1} parent=1 // pred_region
      %49 = dma.done [#allocation3], 256
    $region17: #{tpu_custom_call.1} parent=1 // pred_fallthru
      _
    // Predicated region
    $region18: #{tpu_custom_call.1} parent=1 // pred_check
      _
    $region19: #{tpu_custom_call.1} parent=1 // pred_check_branch
      %51 = sbr.rel (0) target = $region21
    $region20: #{tpu_custom_call.1} parent=1 // pred_region
      %52 = dma.done [#allocation6], 256
    $region21: #{tpu_custom_call.1} parent=1 // pred_fallthru
      _
    // Predicated region
    $region22: #{tpu_custom_call.1} parent=1 // pred_check
      _
    $region23: #{tpu_custom_call.1} parent=1 // pred_check_branch
      %54 = sbr.rel (0) target = $region25
    $region24: #{tpu_custom_call.1} parent=1 // pred_region
      %55 = dma.done [#allocation6], 3968
    $region25: #{tpu_custom_call.1} parent=1 // pred_fallthru
      _
    %v56 = vld [vmem:[#allocation2] sm:$0xff]
    %v57 = vld [vmem:[#allocation2 + $0x8] sm:$0xff]
    %v58 = vld [vmem:[#allocation5] sm:$0xff]
    %v59 = vld [vmem:[#allocation5 + $0x8] sm:$0xff]
    %v60 = vld [vmem:[#allocation7] sm:$0xff]
    %v61 = vld [vmem:[#allocation7 + $0x8] sm:$0xff]
    %v62 = vld [vmem:[#allocation7 + $0x10] sm:$0xff]
    %v63 = vld [vmem:[#allocation7 + $0x18] sm:$0xff]
    %v64 = vld [vmem:[#allocation7 + $0xf0] sm:$0x1]
    %vm65 = vcmask 261120
    %v67 = vsel %vm65, %v58, 0
    %v70 = vsel %vm65, %v59, 0
    %72 = vmatprep.subr.mxu0 0.0
    %73 = vmatpush1.msra.mxu0 %v60
    %74 = vmatprep.subr.mxu0 0.0
    %75 = vmatpush1.msra.mxu0 %v61
    %76 = vmatprep.subr.mxu0 0.0
    %77 = vmatpush1.msra.mxu0 %v62
    %78 = vmatprep.subr.mxu0 0.0
    %79 = vmatpush1.msra.mxu0 %v63
    %80 = vmatprep.subr.mxu0 0.0
    %81 = vmatpush1.msra.mxu0 0.0
    %82 = vmatprep.subr.mxu0 0.0
    %83 = vmatpush1.msra.mxu0 0.0
    %84 = vmatprep.subr.mxu0 0.0
    %85 = vmatpush1.msra.mxu0 0.0
    %86 = vmatprep.subr.mxu0 0.0
    %87 = vmatpush1.msra.mxu0 0.0
    %88 = vmatprep.subr.mxu0 0.0
    %89 = vmatpush1.msra.mxu0 0.0
    %90 = vmatprep.subr.mxu0 0.0
    %91 = vmatpush1.msra.mxu0 0.0
    %92 = vmatprep.subr.mxu0 0.0
    %93 = vmatpush1.msra.mxu0 0.0
    %94 = vmatprep.subr.mxu0 0.0
    %95 = vmatpush1.msra.mxu0 0.0
    %96 = vmatprep.subr.mxu0 0.0
    %97 = vmatpush1.msra.mxu0 0.0
    %98 = vmatprep.subr.mxu0 0.0
    %99 = vmatpush1.msra.mxu0 0.0
    %100 = vmatprep.subr.mxu0 0.0
    %101 = vmatpush1.msra.mxu0 0.0
    %102 = vmatprep.subr.mxu0 0.0
    %103 = vmatpush1.msra.mxu0 0.0
    %104 = vmatprep.subr.mxu0 0.0
    %105 = vmatpush1.msra.mxu0 0.0
    %106 = vmatprep.subr.mxu0 0.0
    %107 = vmatpush1.msra.mxu0 0.0
    %108 = vmatprep.subr.mxu0 0.0
    %109 = vmatpush1.msra.mxu0 0.0
    %110 = vmatprep.subr.mxu0 0.0
    %111 = vmatpush1.msra.mxu0 0.0
    %112 = vmatprep.subr.mxu0 0.0
    %113 = vmatpush1.msra.mxu0 0.0
    %114 = vmatprep.subr.mxu0 0.0
    %115 = vmatpush1.msra.mxu0 0.0
    %116 = vmatprep.subr.mxu0 0.0
    %117 = vmatpush1.msra.mxu0 0.0
    %118 = vmatprep.subr.mxu0 0.0
    %119 = vmatpush1.msra.mxu0 0.0
    %120 = vmatprep.subr.mxu0 0.0
    %121 = vmatpush1.msra.mxu0 0.0
    %122 = vmatprep.subr.mxu0 0.0
    %123 = vmatpush1.msra.mxu0 0.0
    %124 = vmatprep.subr.mxu0 0.0
    %125 = vmatpush1.msra.mxu0 0.0
    %126 = vmatprep.subr.mxu0 0.0
    %127 = vmatpush1.msra.mxu0 0.0
    %128 = vmatprep.subr.mxu0 0.0
    %129 = vmatpush1.msra.mxu0 0.0
    %130 = vmatprep.subr.mxu0 0.0
    %131 = vmatpush1.msra.mxu0 0.0
    %132 = vmatprep.subr.mxu0 0.0
    %133 = vmatpush1.msra.mxu0 0.0
    %134 = vmatprep.subr.mxu0 0.0
    %135 = vmatpush1.msra.mxu0 0.0
    %136 = vmatprep.mubr.f32.mxu0 0.0
    %137 = vmatmul.mubr.f32.gmra.mrb[0].mxu0 %v67
    %v138 = vpop.f32.mrb[0].mxu0
    %v139 = vadd.f32 0.0, %v138
    %v140 = vpop.f32.mrb[0].mxu0
    %141 = vmatprep.mubr.f32.mxu0 0.0
    %142 = vmatmul.mubr.f32.gmra.mrb[0].mxu0 %v70
    %v143 = vpop.f32.mrb[0].mxu0
    %v144 = vadd.f32 0.0, %v143
    %v145 = vpop.f32.mrb[0].mxu0
    %146 = vdwg.mxu0
    %v147 = vlaneseq
    %v148 = vshrl.u32 %v147, 7
    %v149 = vsub.s32 0, %v148
    %v150 = vrot.slane %v64, %v149
    %vm151 = vcmask 130048
    %v153 = vsel %vm151, %v56, 0
    %v156 = vsel %vm151, %v57, 0
    %158 = vmatprep.subr.mxu0 0.0
    %159 = vmatpush1.msra.mxu0 %v139
    %160 = vmatprep.subr.mxu0 0.0
    %161 = vmatpush1.msra.mxu0 %v144
    %162 = vmatprep.subr.mxu0 0.0
    %163 = vmatpush1.msra.mxu0 0.0
    %164 = vmatprep.subr.mxu0 0.0
    %165 = vmatpush1.msra.mxu0 0.0
    %166 = vmatprep.subr.mxu0 0.0
    %167 = vmatpush1.msra.mxu0 0.0
    %168 = vmatprep.subr.mxu0 0.0
    %169 = vmatpush1.msra.mxu0 0.0
    %170 = vmatprep.subr.mxu0 0.0
    %171 = vmatpush1.msra.mxu0 0.0
    %172 = vmatprep.subr.mxu0 0.0
    %173 = vmatpush1.msra.mxu0 0.0
    %174 = vmatprep.subr.mxu0 0.0
    %175 = vmatpush1.msra.mxu0 0.0
    %176 = vmatprep.subr.mxu0 0.0
    %177 = vmatpush1.msra.mxu0 0.0
    %178 = vmatprep.subr.mxu0 0.0
    %179 = vmatpush1.msra.mxu0 0.0
    %180 = vmatprep.subr.mxu0 0.0
    %181 = vmatpush1.msra.mxu0 0.0
    %182 = vmatprep.subr.mxu0 0.0
    %183 = vmatpush1.msra.mxu0 0.0
    %184 = vmatprep.subr.mxu0 0.0
    %185 = vmatpush1.msra.mxu0 0.0
    %186 = vmatprep.subr.mxu0 0.0
    %187 = vmatpush1.msra.mxu0 0.0
    %188 = vmatprep.subr.mxu0 0.0
    %189 = vmatpush1.msra.mxu0 0.0
    %190 = vmatprep.subr.mxu0 0.0
    %191 = vmatpush1.msra.mxu0 0.0
    %192 = vmatprep.subr.mxu0 0.0
    %193 = vmatpush1.msra.mxu0 0.0
    %194 = vmatprep.subr.mxu0 0.0
    %195 = vmatpush1.msra.mxu0 0.0
    %196 = vmatprep.subr.mxu0 0.0
    %197 = vmatpush1.msra.mxu0 0.0
    %198 = vmatprep.subr.mxu0 0.0
    %199 = vmatpush1.msra.mxu0 0.0
    %200 = vmatprep.subr.mxu0 0.0
    %201 = vmatpush1.msra.mxu0 0.0
    %202 = vmatprep.subr.mxu0 0.0
    %203 = vmatpush1.msra.mxu0 0.0
    %204 = vmatprep.subr.mxu0 0.0
    %205 = vmatpush1.msra.mxu0 0.0
    %206 = vmatprep.subr.mxu0 0.0
    %207 = vmatpush1.msra.mxu0 0.0
    %208 = vmatprep.subr.mxu0 0.0
    %209 = vmatpush1.msra.mxu0 0.0
    %210 = vmatprep.subr.mxu0 0.0
    %211 = vmatpush1.msra.mxu0 0.0
    %212 = vmatprep.subr.mxu0 0.0
    %213 = vmatpush1.msra.mxu0 0.0
    %214 = vmatprep.subr.mxu0 0.0
    %215 = vmatpush1.msra.mxu0 0.0
    %216 = vmatprep.subr.mxu0 0.0
    %217 = vmatpush1.msra.mxu0 0.0
    %218 = vmatprep.subr.mxu0 0.0
    %219 = vmatpush1.msra.mxu0 0.0
    %220 = vmatprep.subr.mxu0 0.0
    %221 = vmatpush1.msra.mxu0 0.0
    %222 = vmatprep.mubr.f32.mxu0 0.0
    %223 = vmatmul.mubr.f32.gmra.mrb[0].mxu0 %v153
    %v224 = vpop.f32.mrb[0].mxu0
    %v225 = vadd.f32 %v150, %v224
    %v226 = vpop.f32.mrb[0].mxu0
    %227 = vmatprep.mubr.f32.mxu0 0.0
    %228 = vmatmul.mubr.f32.gmra.mrb[0].mxu0 %v156
    %v229 = vpop.f32.mrb[0].mxu0
    %v230 = vadd.f32 %v150, %v229
    %v231 = vpop.f32.mrb[0].mxu0
    %232 = vdwg.mxu0
    %v233 = vmax.f32 %v225, 0.0
    %v234 = vmax.f32 %v230, 0.0
    %v235 = vld [vmem:[#allocation7 + $0x20] sm:$0xff]
    %v236 = vld [vmem:[#allocation7 + $0x28] sm:$0xff]
    %v237 = vld [vmem:[#allocation7 + $0x30] sm:$0xff]
    %v238 = vld [vmem:[#allocation7 + $0x38] sm:$0xff]
    %v239 = vld [vmem:[#allocation7 + $0x40] sm:$0xff]
    %v240 = vld [vmem:[#allocation7 + $0x48] sm:$0xff]
    %v241 = vld [vmem:[#allocation7 + $0x50] sm:$0xff]
    %v242 = vld [vmem:[#allocation7 + $0x58] sm:$0xff]
    %v243 = vld [vmem:[#allocation7 + $0x60] sm:$0xff]
    %v244 = vld [vmem:[#allocation7 + $0x68] sm:$0xff]
    %v245 = vld [vmem:[#allocation7 + $0x70] sm:$0xff]
    %v246 = vld [vmem:[#allocation7 + $0x78] sm:$0xff]
    %v247 = vld [vmem:[#allocation7 + $0x80] sm:$0xff]
    %v248 = vld [vmem:[#allocation7 + $0x88] sm:$0xff]
    %v249 = vld [vmem:[#allocation7 + $0x90] sm:$0xff]
    %v250 = vld [vmem:[#allocation7 + $0x98] sm:$0xff]
    %v251 = vld [vmem:[#allocation7 + $0xf1] sm:$0x1]
    %252 = vmatprep.subr.mxu0 0.0
    %253 = vmatpush1.msra.mxu0 %v235
    %254 = vmatprep.subr.mxu0 0.0
    %255 = vmatpush1.msra.mxu0 %v236
    %256 = vmatprep.subr.mxu0 0.0
    %257 = vmatpush1.msra.mxu0 %v237
    %258 = vmatprep.subr.mxu0 0.0
    %259 = vmatpush1.msra.mxu0 %v238
    %260 = vmatprep.subr.mxu0 0.0
    %261 = vmatpush1.msra.mxu0 %v239
    %262 = vmatprep.subr.mxu0 0.0
    %263 = vmatpush1.msra.mxu0 %v240
    %264 = vmatprep.subr.mxu0 0.0
    %265 = vmatpush1.msra.mxu0 %v241
    %266 = vmatprep.subr.mxu0 0.0
    %267 = vmatpush1.msra.mxu0 %v242
    %268 = vmatprep.subr.mxu0 0.0
    %269 = vmatpush1.msra.mxu0 %v243
    %270 = vmatprep.subr.mxu0 0.0
    %271 = vmatpush1.msra.mxu0 %v244
    %272 = vmatprep.subr.mxu0 0.0
    %273 = vmatpush1.msra.mxu0 %v245
    %274 = vmatprep.subr.mxu0 0.0
    %275 = vmatpush1.msra.mxu0 %v246
    %276 = vmatprep.subr.mxu0 0.0
    %277 = vmatpush1.msra.mxu0 %v247
    %278 = vmatprep.subr.mxu0 0.0
    %279 = vmatpush1.msra.mxu0 %v248
    %280 = vmatprep.subr.mxu0 0.0
    %281 = vmatpush1.msra.mxu0 %v249
    %282 = vmatprep.subr.mxu0 0.0
    %283 = vmatpush1.msra.mxu0 %v250
    %284 = vmatprep.subr.mxu0 0.0
    %285 = vmatpush1.msra.mxu0 0.0
    %286 = vmatprep.subr.mxu0 0.0
    %287 = vmatpush1.msra.mxu0 0.0
    %288 = vmatprep.subr.mxu0 0.0
    %289 = vmatpush1.msra.mxu0 0.0
    %290 = vmatprep.subr.mxu0 0.0
    %291 = vmatpush1.msra.mxu0 0.0
    %292 = vmatprep.subr.mxu0 0.0
    %293 = vmatpush1.msra.mxu0 0.0
    %294 = vmatprep.subr.mxu0 0.0
    %295 = vmatpush1.msra.mxu0 0.0
    %296 = vmatprep.subr.mxu0 0.0
    %297 = vmatpush1.msra.mxu0 0.0
    %298 = vmatprep.subr.mxu0 0.0
    %299 = vmatpush1.msra.mxu0 0.0
    %300 = vmatprep.subr.mxu0 0.0
    %301 = vmatpush1.msra.mxu0 0.0
    %302 = vmatprep.subr.mxu0 0.0
    %303 = vmatpush1.msra.mxu0 0.0
    %304 = vmatprep.subr.mxu0 0.0
    %305 = vmatpush1.msra.mxu0 0.0
    %306 = vmatprep.subr.mxu0 0.0
    %307 = vmatpush1.msra.mxu0 0.0
    %308 = vmatprep.subr.mxu0 0.0
    %309 = vmatpush1.msra.mxu0 0.0
    %310 = vmatprep.subr.mxu0 0.0
    %311 = vmatpush1.msra.mxu0 0.0
    %312 = vmatprep.subr.mxu0 0.0
    %313 = vmatpush1.msra.mxu0 0.0
    %314 = vmatprep.subr.mxu0 0.0
    %315 = vmatpush1.msra.mxu0 0.0
    %316 = vmatprep.mubr.f32.mxu0 0.0
    %317 = vmatmul.mubr.f32.gmra.mrb[0].mxu0 %v233
    %v318 = vpop.f32.mrb[0].mxu0
    %v319 = vadd.f32 0.0, %v318
    %v320 = vpop.f32.mrb[0].mxu0
    %321 = vmatprep.mubr.f32.mxu0 0.0
    %322 = vmatmul.mubr.f32.gmra.mrb[0].mxu0 %v234
    %v323 = vpop.f32.mrb[0].mxu0
    %v324 = vadd.f32 0.0, %v323
    %v325 = vpop.f32.mrb[0].mxu0
    %326 = vdwg.mxu0
    %v327 = vlaneseq
    %v328 = vshrl.u32 %v327, 7
    %v329 = vsub.s32 0, %v328
    %v330 = vrot.slane %v251, %v329
    %331 = vmatprep.subr.mxu0 0.0
    %332 = vmatpush1.msra.mxu0 %v319
    %333 = vmatprep.subr.mxu0 0.0
    %334 = vmatpush1.msra.mxu0 %v324
    %335 = vmatprep.subr.mxu0 0.0
    %336 = vmatpush1.msra.mxu0 0.0
    %337 = vmatprep.subr.mxu0 0.0
    %338 = vmatpush1.msra.mxu0 0.0
    %339 = vmatprep.subr.mxu0 0.0
    %340 = vmatpush1.msra.mxu0 0.0
    %341 = vmatprep.subr.mxu0 0.0
    %342 = vmatpush1.msra.mxu0 0.0
    %343 = vmatprep.subr.mxu0 0.0
    %344 = vmatpush1.msra.mxu0 0.0
    %345 = vmatprep.subr.mxu0 0.0
    %346 = vmatpush1.msra.mxu0 0.0
    %347 = vmatprep.subr.mxu0 0.0
    %348 = vmatpush1.msra.mxu0 0.0
    %349 = vmatprep.subr.mxu0 0.0
    %350 = vmatpush1.msra.mxu0 0.0
    %351 = vmatprep.subr.mxu0 0.0
    %352 = vmatpush1.msra.mxu0 0.0
    %353 = vmatprep.subr.mxu0 0.0
    %354 = vmatpush1.msra.mxu0 0.0
    %355 = vmatprep.subr.mxu0 0.0
    %356 = vmatpush1.msra.mxu0 0.0
    %357 = vmatprep.subr.mxu0 0.0
    %358 = vmatpush1.msra.mxu0 0.0
    %359 = vmatprep.subr.mxu0 0.0
    %360 = vmatpush1.msra.mxu0 0.0
    %361 = vmatprep.subr.mxu0 0.0
    %362 = vmatpush1.msra.mxu0 0.0
    %363 = vmatprep.subr.mxu0 0.0
    %364 = vmatpush1.msra.mxu0 0.0
    %365 = vmatprep.subr.mxu0 0.0
    %366 = vmatpush1.msra.mxu0 0.0
    %367 = vmatprep.subr.mxu0 0.0
    %368 = vmatpush1.msra.mxu0 0.0
    %369 = vmatprep.subr.mxu0 0.0
    %370 = vmatpush1.msra.mxu0 0.0
    %371 = vmatprep.subr.mxu0 0.0
    %372 = vmatpush1.msra.mxu0 0.0
    %373 = vmatprep.subr.mxu0 0.0
    %374 = vmatpush1.msra.mxu0 0.0
    %375 = vmatprep.subr.mxu0 0.0
    %376 = vmatpush1.msra.mxu0 0.0
    %377 = vmatprep.subr.mxu0 0.0
    %378 = vmatpush1.msra.mxu0 0.0
    %379 = vmatprep.subr.mxu0 0.0
    %380 = vmatpush1.msra.mxu0 0.0
    %381 = vmatprep.subr.mxu0 0.0
    %382 = vmatpush1.msra.mxu0 0.0
    %383 = vmatprep.subr.mxu0 0.0
    %384 = vmatpush1.msra.mxu0 0.0
    %385 = vmatprep.subr.mxu0 0.0
    %386 = vmatpush1.msra.mxu0 0.0
    %387 = vmatprep.subr.mxu0 0.0
    %388 = vmatpush1.msra.mxu0 0.0
    %389 = vmatprep.subr.mxu0 0.0
    %390 = vmatpush1.msra.mxu0 0.0
    %391 = vmatprep.subr.mxu0 0.0
    %392 = vmatpush1.msra.mxu0 0.0
    %393 = vmatprep.subr.mxu0 0.0
    %394 = vmatpush1.msra.mxu0 0.0
    %395 = vmatprep.mubr.f32.mxu0 0.0
    %396 = vmatmul.mubr.f32.gmra.mrb[0].mxu0 %v153
    %v397 = vpop.f32.mrb[0].mxu0
    %v398 = vadd.f32 %v330, %v397
    %v399 = vpop.f32.mrb[0].mxu0
    %400 = vmatprep.mubr.f32.mxu0 0.0
    %401 = vmatmul.mubr.f32.gmra.mrb[0].mxu0 %v156
    %v402 = vpop.f32.mrb[0].mxu0
    %v403 = vadd.f32 %v330, %v402
    %v404 = vpop.f32.mrb[0].mxu0
    %405 = vdwg.mxu0
    %v406 = vmax.f32 %v398, 0.0
    %v407 = vmax.f32 %v403, 0.0
    %v408 = vld [vmem:[#allocation7 + $0xa0] sm:$0xff]
    %v409 = vld [vmem:[#allocation7 + $0xa8] sm:$0xff]
    %v410 = vld [vmem:[#allocation7 + $0xb0] sm:$0xff]
    %v411 = vld [vmem:[#allocation7 + $0xb8] sm:$0xff]
    %v412 = vld [vmem:[#allocation7 + $0xc0] sm:$0xff]
    %v413 = vld [vmem:[#allocation7 + $0xc8] sm:$0xff]
    %v414 = vld [vmem:[#allocation7 + $0xd0] sm:$0xff]
    %v415 = vld [vmem:[#allocation7 + $0xd8] sm:$0xff]
    %v416 = vld [vmem:[#allocation7 + $0xf2] sm:$0x1]
    %vm417 = vcmask 523264
    %v419 = vsel %vm417, %v406, 0
    %v422 = vsel %vm417, %v407, 0
    %424 = vmatprep.subr.mxu0 0.0
    %425 = vmatpush1.msra.mxu0 %v408
    %426 = vmatprep.subr.mxu0 0.0
    %427 = vmatpush1.msra.mxu0 %v409
    %428 = vmatprep.subr.mxu0 0.0
    %429 = vmatpush1.msra.mxu0 %v410
    %430 = vmatprep.subr.mxu0 0.0
    %431 = vmatpush1.msra.mxu0 %v411
    %432 = vmatprep.subr.mxu0 0.0
    %433 = vmatpush1.msra.mxu0 %v412
    %434 = vmatprep.subr.mxu0 0.0
    %435 = vmatpush1.msra.mxu0 %v413
    %436 = vmatprep.subr.mxu0 0.0
    %437 = vmatpush1.msra.mxu0 %v414
    %438 = vmatprep.subr.mxu0 0.0
    %439 = vmatpush1.msra.mxu0 %v415
    %440 = vmatprep.subr.mxu0 0.0
    %441 = vmatpush1.msra.mxu0 0.0
    %442 = vmatprep.subr.mxu0 0.0
    %443 = vmatpush1.msra.mxu0 0.0
    %444 = vmatprep.subr.mxu0 0.0
    %445 = vmatpush1.msra.mxu0 0.0
    %446 = vmatprep.subr.mxu0 0.0
    %447 = vmatpush1.msra.mxu0 0.0
    %448 = vmatprep.subr.mxu0 0.0
    %449 = vmatpush1.msra.mxu0 0.0
    %450 = vmatprep.subr.mxu0 0.0
    %451 = vmatpush1.msra.mxu0 0.0
    %452 = vmatprep.subr.mxu0 0.0
    %453 = vmatpush1.msra.mxu0 0.0
    %454 = vmatprep.subr.mxu0 0.0
    %455 = vmatpush1.msra.mxu0 0.0
    %456 = vmatprep.subr.mxu0 0.0
    %457 = vmatpush1.msra.mxu0 0.0
    %458 = vmatprep.subr.mxu0 0.0
    %459 = vmatpush1.msra.mxu0 0.0
    %460 = vmatprep.subr.mxu0 0.0
    %461 = vmatpush1.msra.mxu0 0.0
    %462 = vmatprep.subr.mxu0 0.0
    %463 = vmatpush1.msra.mxu0 0.0
    %464 = vmatprep.subr.mxu0 0.0
    %465 = vmatpush1.msra.mxu0 0.0
    %466 = vmatprep.subr.mxu0 0.0
    %467 = vmatpush1.msra.mxu0 0.0
    %468 = vmatprep.subr.mxu0 0.0
    %469 = vmatpush1.msra.mxu0 0.0
    %470 = vmatprep.subr.mxu0 0.0
    %471 = vmatpush1.msra.mxu0 0.0
    %472 = vmatprep.subr.mxu0 0.0
    %473 = vmatpush1.msra.mxu0 0.0
    %474 = vmatprep.subr.mxu0 0.0
    %475 = vmatpush1.msra.mxu0 0.0
    %476 = vmatprep.subr.mxu0 0.0
    %477 = vmatpush1.msra.mxu0 0.0
    %478 = vmatprep.subr.mxu0 0.0
    %479 = vmatpush1.msra.mxu0 0.0
    %480 = vmatprep.subr.mxu0 0.0
    %481 = vmatpush1.msra.mxu0 0.0
    %482 = vmatprep.subr.mxu0 0.0
    %483 = vmatpush1.msra.mxu0 0.0
    %484 = vmatprep.subr.mxu0 0.0
    %485 = vmatpush1.msra.mxu0 0.0
    %486 = vmatprep.subr.mxu0 0.0
    %487 = vmatpush1.msra.mxu0 0.0
    %488 = vmatprep.mubr.f32.mxu0 0.0
    %489 = vmatmul.mubr.f32.gmra.mrb[0].mxu0 %v419
    %v490 = vpop.f32.mrb[0].mxu0
    %v491 = vadd.f32 0.0, %v490
    %v492 = vpop.f32.mrb[0].mxu0
    %493 = vmatprep.mubr.f32.mxu0 0.0
    %494 = vmatmul.mubr.f32.gmra.mrb[0].mxu0 %v422
    %v495 = vpop.f32.mrb[0].mxu0
    %v496 = vadd.f32 0.0, %v495
    %v497 = vpop.f32.mrb[0].mxu0
    %498 = vdwg.mxu0
    %v499 = vlaneseq
    %v500 = vshrl.u32 %v499, 7
    %v501 = vsub.s32 0, %v500
    %v502 = vrot.slane %v416, %v501
    %503 = vmatprep.subr.mxu0 0.0
    %504 = vmatpush1.msra.mxu0 %v491
    %505 = vmatprep.subr.mxu0 0.0
    %506 = vmatpush1.msra.mxu0 %v496
    %507 = vmatprep.subr.mxu0 0.0
    %508 = vmatpush1.msra.mxu0 0.0
    %509 = vmatprep.subr.mxu0 0.0
    %510 = vmatpush1.msra.mxu0 0.0
    %511 = vmatprep.subr.mxu0 0.0
    %512 = vmatpush1.msra.mxu0 0.0
    %513 = vmatprep.subr.mxu0 0.0
    %514 = vmatpush1.msra.mxu0 0.0
    %515 = vmatprep.subr.mxu0 0.0
    %516 = vmatpush1.msra.mxu0 0.0
    %517 = vmatprep.subr.mxu0 0.0
    %518 = vmatpush1.msra.mxu0 0.0
    %519 = vmatprep.subr.mxu0 0.0
    %520 = vmatpush1.msra.mxu0 0.0
    %521 = vmatprep.subr.mxu0 0.0
    %522 = vmatpush1.msra.mxu0 0.0
    %523 = vmatprep.subr.mxu0 0.0
    %524 = vmatpush1.msra.mxu0 0.0
    %525 = vmatprep.subr.mxu0 0.0
    %526 = vmatpush1.msra.mxu0 0.0
    %527 = vmatprep.subr.mxu0 0.0
    %528 = vmatpush1.msra.mxu0 0.0
    %529 = vmatprep.subr.mxu0 0.0
    %530 = vmatpush1.msra.mxu0 0.0
    %531 = vmatprep.subr.mxu0 0.0
    %532 = vmatpush1.msra.mxu0 0.0
    %533 = vmatprep.subr.mxu0 0.0
    %534 = vmatpush1.msra.mxu0 0.0
    %535 = vmatprep.subr.mxu0 0.0
    %536 = vmatpush1.msra.mxu0 0.0
    %537 = vmatprep.subr.mxu0 0.0
    %538 = vmatpush1.msra.mxu0 0.0
    %539 = vmatprep.subr.mxu0 0.0
    %540 = vmatpush1.msra.mxu0 0.0
    %541 = vmatprep.subr.mxu0 0.0
    %542 = vmatpush1.msra.mxu0 0.0
    %543 = vmatprep.subr.mxu0 0.0
    %544 = vmatpush1.msra.mxu0 0.0
    %545 = vmatprep.subr.mxu0 0.0
    %546 = vmatpush1.msra.mxu0 0.0
    %547 = vmatprep.subr.mxu0 0.0
    %548 = vmatpush1.msra.mxu0 0.0
    %549 = vmatprep.subr.mxu0 0.0
    %550 = vmatpush1.msra.mxu0 0.0
    %551 = vmatprep.subr.mxu0 0.0
    %552 = vmatpush1.msra.mxu0 0.0
    %553 = vmatprep.subr.mxu0 0.0
    %554 = vmatpush1.msra.mxu0 0.0
    %555 = vmatprep.subr.mxu0 0.0
    %556 = vmatpush1.msra.mxu0 0.0
    %557 = vmatprep.subr.mxu0 0.0
    %558 = vmatpush1.msra.mxu0 0.0
    %559 = vmatprep.subr.mxu0 0.0
    %560 = vmatpush1.msra.mxu0 0.0
    %561 = vmatprep.subr.mxu0 0.0
    %562 = vmatpush1.msra.mxu0 0.0
    %563 = vmatprep.subr.mxu0 0.0
    %564 = vmatpush1.msra.mxu0 0.0
    %565 = vmatprep.subr.mxu0 0.0
    %566 = vmatpush1.msra.mxu0 0.0
    %567 = vmatprep.mubr.f32.mxu0 0.0
    %568 = vmatmul.mubr.f32.gmra.mrb[0].mxu0 %v153
    %v569 = vpop.f32.mrb[0].mxu0
    %v570 = vadd.f32 %v502, %v569
    %v571 = vpop.f32.mrb[0].mxu0
    %572 = vmatprep.mubr.f32.mxu0 0.0
    %573 = vmatmul.mubr.f32.gmra.mrb[0].mxu0 %v156
    %v574 = vpop.f32.mrb[0].mxu0
    %v575 = vadd.f32 %v502, %v574
    %v576 = vpop.f32.mrb[0].mxu0
    %577 = vdwg.mxu0
    %v578 = vmax.f32 %v570, 0.0
    %v579 = vmax.f32 %v575, 0.0
    %v580 = vld [vmem:[#allocation7 + $0xe0] sm:$0xff]
    %v581 = vld [vmem:[#allocation7 + $0xe8] sm:$0xff]
    %v582 = vld [vmem:[#allocation7 + $0xf3] sm:$0x1]
    %v584 = vsel %vm151, %v578, 0
    %v587 = vsel %vm151, %v579, 0
    %589 = vmatprep.subr.mxu0 0.0
    %590 = vmatpush1.msra.mxu0 %v580
    %591 = vmatprep.subr.mxu0 0.0
    %592 = vmatpush1.msra.mxu0 %v581
    %593 = vmatprep.subr.mxu0 0.0
    %594 = vmatpush1.msra.mxu0 0.0
    %595 = vmatprep.subr.mxu0 0.0
    %596 = vmatpush1.msra.mxu0 0.0
    %597 = vmatprep.subr.mxu0 0.0
    %598 = vmatpush1.msra.mxu0 0.0
    %599 = vmatprep.subr.mxu0 0.0
    %600 = vmatpush1.msra.mxu0 0.0
    %601 = vmatprep.subr.mxu0 0.0
    %602 = vmatpush1.msra.mxu0 0.0
    %603 = vmatprep.subr.mxu0 0.0
    %604 = vmatpush1.msra.mxu0 0.0
    %605 = vmatprep.subr.mxu0 0.0
    %606 = vmatpush1.msra.mxu0 0.0
    %607 = vmatprep.subr.mxu0 0.0
    %608 = vmatpush1.msra.mxu0 0.0
    %609 = vmatprep.subr.mxu0 0.0
    %610 = vmatpush1.msra.mxu0 0.0
    %611 = vmatprep.subr.mxu0 0.0
    %612 = vmatpush1.msra.mxu0 0.0
    %613 = vmatprep.subr.mxu0 0.0
    %614 = vmatpush1.msra.mxu0 0.0
    %615 = vmatprep.subr.mxu0 0.0
    %616 = vmatpush1.msra.mxu0 0.0
    %617 = vmatprep.subr.mxu0 0.0
    %618 = vmatpush1.msra.mxu0 0.0
    %619 = vmatprep.subr.mxu0 0.0
    %620 = vmatpush1.msra.mxu0 0.0
    %621 = vmatprep.subr.mxu0 0.0
    %622 = vmatpush1.msra.mxu0 0.0
    %623 = vmatprep.subr.mxu0 0.0
    %624 = vmatpush1.msra.mxu0 0.0
    %625 = vmatprep.subr.mxu0 0.0
    %626 = vmatpush1.msra.mxu0 0.0
    %627 = vmatprep.subr.mxu0 0.0
    %628 = vmatpush1.msra.mxu0 0.0
    %629 = vmatprep.subr.mxu0 0.0
    %630 = vmatpush1.msra.mxu0 0.0
    %631 = vmatprep.subr.mxu0 0.0
    %632 = vmatpush1.msra.mxu0 0.0
    %633 = vmatprep.subr.mxu0 0.0
    %634 = vmatpush1.msra.mxu0 0.0
    %635 = vmatprep.subr.mxu0 0.0
    %636 = vmatpush1.msra.mxu0 0.0
    %637 = vmatprep.subr.mxu0 0.0
    %638 = vmatpush1.msra.mxu0 0.0
    %639 = vmatprep.subr.mxu0 0.0
    %640 = vmatpush1.msra.mxu0 0.0
    %641 = vmatprep.subr.mxu0 0.0
    %642 = vmatpush1.msra.mxu0 0.0
    %643 = vmatprep.subr.mxu0 0.0
    %644 = vmatpush1.msra.mxu0 0.0
    %645 = vmatprep.subr.mxu0 0.0
    %646 = vmatpush1.msra.mxu0 0.0
    %647 = vmatprep.subr.mxu0 0.0
    %648 = vmatpush1.msra.mxu0 0.0
    %649 = vmatprep.subr.mxu0 0.0
    %650 = vmatpush1.msra.mxu0 0.0
    %651 = vmatprep.subr.mxu0 0.0
    %652 = vmatpush1.msra.mxu0 0.0
    %653 = vmatprep.mubr.f32.mxu0 0.0
    %654 = vmatmul.mubr.f32.gmra.mrb[0].mxu0 %v584
    %v655 = vpop.f32.mrb[0].mxu0
    %v656 = vadd.f32 0.0, %v655
    %v657 = vpop.f32.mrb[0].mxu0
    %658 = vmatprep.mubr.f32.mxu0 0.0
    %659 = vmatmul.mubr.f32.gmra.mrb[0].mxu0 %v587
    %v660 = vpop.f32.mrb[0].mxu0
    %v661 = vadd.f32 0.0, %v660
    %v662 = vpop.f32.mrb[0].mxu0
    %663 = vdwg.mxu0
    %v664 = vlaneseq
    %v665 = vshrl.u32 %v664, 7
    %v666 = vsub.s32 0, %v665
    %v667 = vrot.slane %v582, %v666
    %668 = vmatprep.subr.mxu0 0.0
    %669 = vmatpush1.msra.mxu0 %v656
    %670 = vmatprep.subr.mxu0 0.0
    %671 = vmatpush1.msra.mxu0 %v661
    %672 = vmatprep.subr.mxu0 0.0
    %673 = vmatpush1.msra.mxu0 0.0
    %674 = vmatprep.subr.mxu0 0.0
    %675 = vmatpush1.msra.mxu0 0.0
    %676 = vmatprep.subr.mxu0 0.0
    %677 = vmatpush1.msra.mxu0 0.0
    %678 = vmatprep.subr.mxu0 0.0
    %679 = vmatpush1.msra.mxu0 0.0
    %680 = vmatprep.subr.mxu0 0.0
    %681 = vmatpush1.msra.mxu0 0.0
    %682 = vmatprep.subr.mxu0 0.0
    %683 = vmatpush1.msra.mxu0 0.0
    %684 = vmatprep.subr.mxu0 0.0
    %685 = vmatpush1.msra.mxu0 0.0
    %686 = vmatprep.subr.mxu0 0.0
    %687 = vmatpush1.msra.mxu0 0.0
    %688 = vmatprep.subr.mxu0 0.0
    %689 = vmatpush1.msra.mxu0 0.0
    %690 = vmatprep.subr.mxu0 0.0
    %691 = vmatpush1.msra.mxu0 0.0
    %692 = vmatprep.subr.mxu0 0.0
    %693 = vmatpush1.msra.mxu0 0.0
    %694 = vmatprep.subr.mxu0 0.0
    %695 = vmatpush1.msra.mxu0 0.0
    %696 = vmatprep.subr.mxu0 0.0
    %697 = vmatpush1.msra.mxu0 0.0
    %698 = vmatprep.subr.mxu0 0.0
    %699 = vmatpush1.msra.mxu0 0.0
    %700 = vmatprep.subr.mxu0 0.0
    %701 = vmatpush1.msra.mxu0 0.0
    %702 = vmatprep.subr.mxu0 0.0
    %703 = vmatpush1.msra.mxu0 0.0
    %704 = vmatprep.subr.mxu0 0.0
    %705 = vmatpush1.msra.mxu0 0.0
    %706 = vmatprep.subr.mxu0 0.0
    %707 = vmatpush1.msra.mxu0 0.0
    %708 = vmatprep.subr.mxu0 0.0
    %709 = vmatpush1.msra.mxu0 0.0
    %710 = vmatprep.subr.mxu0 0.0
    %711 = vmatpush1.msra.mxu0 0.0
    %712 = vmatprep.subr.mxu0 0.0
    %713 = vmatpush1.msra.mxu0 0.0
    %714 = vmatprep.subr.mxu0 0.0
    %715 = vmatpush1.msra.mxu0 0.0
    %716 = vmatprep.subr.mxu0 0.0
    %717 = vmatpush1.msra.mxu0 0.0
    %718 = vmatprep.subr.mxu0 0.0
    %719 = vmatpush1.msra.mxu0 0.0
    %720 = vmatprep.subr.mxu0 0.0
    %721 = vmatpush1.msra.mxu0 0.0
    %722 = vmatprep.subr.mxu0 0.0
    %723 = vmatpush1.msra.mxu0 0.0
    %724 = vmatprep.subr.mxu0 0.0
    %725 = vmatpush1.msra.mxu0 0.0
    %726 = vmatprep.subr.mxu0 0.0
    %727 = vmatpush1.msra.mxu0 0.0
    %728 = vmatprep.subr.mxu0 0.0
    %729 = vmatpush1.msra.mxu0 0.0
    %730 = vmatprep.subr.mxu0 0.0
    %731 = vmatpush1.msra.mxu0 0.0
    %732 = vmatprep.mubr.f32.mxu0 0.0
    %733 = vmatmul.mubr.f32.gmra.mrb[0].mxu0 %v153
    %v734 = vpop.f32.mrb[0].mxu0
    %v735 = vadd.f32 %v667, %v734
    %v736 = vpop.f32.mrb[0].mxu0
    %737 = vmatprep.mubr.f32.mxu0 0.0
    %738 = vmatmul.mubr.f32.gmra.mrb[0].mxu0 %v156
    %v739 = vpop.f32.mrb[0].mxu0
    %v740 = vadd.f32 %v667, %v739
    %v741 = vpop.f32.mrb[0].mxu0
    %742 = vdwg.mxu0
    %743 = vst [vmem:[#allocation8] sm:$0xff] %v735
    %744 = vst [vmem:[#allocation8 + $0x8] sm:$0xff] %v740
    // Predicated region
    $region26: #{tpu_custom_call.1} parent=1 // pred_check
      _
    $region27: #{tpu_custom_call.1} parent=1 // pred_check_branch
      %746 = sbr.rel (0) target = $region29
    $region28: #{tpu_custom_call.1} parent=1 // pred_region
      %s748 = ssub.s32 256, 256
      %749 = vsyncadd [#allocation4], %s748
      %s750 = sshll.u32 [#allocation8], 4
      %s751 = int_to_ptr.vmem [resolvable:$true] %s750
      %756 = dma.vmem_to_hbm [thread:$0]  %s751, 256, %s3, [#allocation4], 128, 128, 8
    $region29: #{tpu_custom_call.1} parent=1 // pred_fallthru
      _
    // Predicated region
    $region30: #{tpu_custom_call.1} parent=1 // pred_check
      _
    $region31: #{tpu_custom_call.1} parent=1 // pred_check_branch
      %758 = sbr.rel (0) target = $region33
    $region32: #{tpu_custom_call.1} parent=1 // pred_region
      %759 = dma.done [#allocation4], 256
    $region33: #{tpu_custom_call.1} parent=1 // pred_fallthru
      _
    %760 = vsyncpa [#allocation3], 1
    %761 = vsyncpa [#allocation6], 1
    %762 = vsyncpa [#allocation4], 1

</llo_original>
